<compile_context>
chip_gen: v5e
topology: v5e:2x2
jax: 0.10.0
libtpu: 0.0.40
codegen_flags: <defaults>
</compile_context>

<pallas_src>
import functools

import jax
import jax.numpy as jnp
from jax.experimental import pallas as pl
from jax.experimental.pallas import tpu as pltpu


def _normalize_kernel(x_ref, o_ref, *, power: float, is_int_power: bool):
    # Compute in f32 for accuracy regardless of input dtype.
    x = x_ref[...].astype(jnp.float32)

    if power == 2.0:
        s = jnp.sum(x * x, axis=-1, keepdims=True)
        inv = jax.lax.rsqrt(s)  # one EUP op per row, broadcast mul on VPU
    else:
        if is_int_power:
            # Signed integer power via repeated multiplication (matches torch
            # x.pow(int) exactly, including odd powers on negative inputs).
            p = int(power)
            pow_x = x
            for _ in range(p - 1):
                pow_x = pow_x * x
        else:
            # TODO(synk): torch pow(negative, non-integer) yields NaN; we use
            # |x|**power here, so only non-negative inputs match exactly.
            pow_x = jnp.abs(x) ** power
        s = jnp.sum(pow_x, axis=-1, keepdims=True)
        inv = s ** (-1.0 / power)

    o_ref[...] = (x * inv).astype(o_ref.dtype)


def _pick_tile_n(n: int, d: int, itemsize: int) -> int:
    """Pick a row-tile size for the batch axis.

    Sizing rule: each (tile_n, D) block is resident ~4x (input + output, each
    double-buffered), so we cap a single block at ~8 MiB -> ~32 MiB working
    set, well under the 48 MiB VMEM limit requested below (and under v7x's
    64 MiB physical VMEM).  We also keep >= ~8 grid steps when the batch is
    large so both v7x TensorCores get work and the pipeline has depth.
    """
    per_block_budget = 8 << 20  # 8 MiB per (tile_n, D) block
    tile = per_block_budget // max(d * itemsize, 1)
    tile = min(tile, pl.cdiv(n, 8))          # keep several grid steps
    tile = max(8, (tile // 8) * 8)           # multiple of 8 sublanes
    tile = min(tile, n)                      # never exceed the batch
    return tile


def normalize(x: jax.Array, power: int = 2, tile_n: int | None = None) -> jax.Array:
    """Lp-normalize rows of a 2-D array (N, D) along the last axis (torch dim=1)."""
    n, d = x.shape
    itemsize = jnp.dtype(x.dtype).itemsize

    if tile_n is None:
        tile_n = _pick_tile_n(n, d, itemsize)
    else:
        tile_n = min(tile_n, n)
        if tile_n < n:
            # Block second-to-last dim must be a multiple of 8 (or the full dim).
            tile_n = max(8, (tile_n // 8) * 8)

    grid = pl.cdiv(n, tile_n)

    p = float(power)
    kernel = functools.partial(
        _normalize_kernel,
        power=p,
        is_int_power=(p.is_integer() and p > 0),
    )

    return pl.pallas_call(
        kernel,
        out_shape=jax.ShapeDtypeStruct((n, d), x.dtype),
        grid_spec=pltpu.PrefetchScalarGridSpec(
            num_scalar_prefetch=0,
            grid=(grid,),
            in_specs=[pl.BlockSpec((tile_n, d), lambda i: (i, 0))],
            out_specs=pl.BlockSpec((tile_n, d), lambda i: (i, 0)),
        ),
        compiler_params=pltpu.CompilerParams(
            dimension_semantics=("parallel",),
            # Big enough for the ~32 MiB double-buffered working set, with
            # headroom, and still safe on v7x's 64 MiB physical VMEM.
            vmem_limit_bytes=48 << 20,
        ),
    )(x)


if __name__ == "__main__":
    key = jax.random.PRNGKey(0)

    # Test 1: small embedding batch as used in CompRess (batch=8, hidden=128),
    # single grid step, power=2 default.
    x1 = jax.random.normal(key, (8, 128), dtype=jnp.float32)
    out1 = jax.block_until_ready(normalize(x1, power=2))
    ref1 = x1 / jnp.sum(x1 ** 2, axis=1, keepdims=True) ** 0.5
    assert out1.shape == x1.shape and out1.dtype == x1.dtype
    assert jnp.allclose(out1, ref1, atol=1e-5, rtol=1e-5)

    # Test 2: non-multiple batch to exercise multi-step grid + padded tail tile.
    x2 = jax.random.normal(jax.random.PRNGKey(1), (100, 256), dtype=jnp.float32)
    out2 = jax.block_until_ready(normalize(x2, power=2, tile_n=8))
    ref2 = x2 / jnp.sum(x2 ** 2, axis=1, keepdims=True) ** 0.5
    assert out2.shape == x2.shape and out2.dtype == x2.dtype
    assert jnp.allclose(out2, ref2, atol=1e-5, rtol=1e-5)

    print("KERNEL_OK")
</pallas_src>

<mosaic_0001>
module attributes {stable_mosaic.version = 11 : i64} {
  func.func @_normalize_kernel(%arg0: i32, %arg1: memref<8x128xf32, #tpu.memory_space<vmem>>, %arg2: memref<8x128xf32, #tpu.memory_space<vmem>>) attributes {dimension_semantics = [#tpu.dimension_semantics<parallel>], iteration_bounds = array<i64: 1>, scalar_prefetch = 0 : i64, scratch_operands = 0 : i64, tpu.core_type = #tpu.core_type<tc>, window_params = [{transform_indices = @transform_0, window_bounds = array<i64: 8, 128>}, {transform_indices = @transform_1, window_bounds = array<i64: 8, 128>}]} {
    %c0 = arith.constant 0 : index
    %c0_0 = arith.constant 0 : index
    %0 = vector.load %arg1[%c0, %c0_0] : memref<8x128xf32, #tpu.memory_space<vmem>>, vector<8x128xf32>
    %1 = arith.mulf %0, %0 : vector<8x128xf32>
    %cst = arith.constant dense<0.000000e+00> : vector<8xf32>
    %2 = vector.multi_reduction <add>, %1, %cst [1] : vector<8x128xf32> to vector<8xf32>
    %3 = vector.shape_cast %2 : vector<8xf32> to vector<8x1xf32>
    %4 = math.rsqrt %3 : vector<8x1xf32>
    %5 = vector.broadcast %4 : vector<8x1xf32> to vector<8x128xf32>
    %6 = arith.mulf %0, %5 : vector<8x128xf32>
    %c0_1 = arith.constant 0 : index
    %c0_2 = arith.constant 0 : index
    %7 = vector.load %arg2[%c0_1, %c0_2] : memref<8x128xf32, #tpu.memory_space<vmem>>, vector<8x128xf32>
    tpu.vector_store %arg2[%c0_1, %c0_2], %6 {strides = array<i32>} : memref<8x128xf32, #tpu.memory_space<vmem>>, vector<8x128xf32>,
    return
  }
  func.func @transform_0(%arg0: i32) -> (i32, i32) {
    %c0_i32 = arith.constant 0 : i32
    %c0_i32_0 = arith.constant 0 : i32
    return %arg0, %c0_i32 : i32, i32
  }
  func.func @transform_1(%arg0: i32) -> (i32, i32) {
    %c0_i32 = arith.constant 0 : i32
    %c0_i32_0 = arith.constant 0 : i32
    return %arg0, %c0_i32 : i32, i32
  }
}

</mosaic_0001>

<llo_original>
// kernel: tpu_custom_call.1
$region0: #{tpu_custom_call.1}
  #allocation0 [shape = 'u32[]', space=smem, size = 0x4, offset = 0x4, fixed_abs, tag = 'smem constant byte address 0x4 - core index']
  #allocation1 [shape = 'u32[72,128]{1,0:T(1,128)}', space=vmem, size = 0x9000, scoped, tag = 'internal scratch']
  %s0 = inlined_call_operand.hbm [shape: f32[8,128], index: 0, kind: input, shape index: {}]
  %s1 = inlined_call_operand.hbm [shape: f32[8,128], index: 1, kind: output, shape index: {}]
  %s2 = sld [smem:[#allocation0]]
  $region18: #{tpu_custom_call.1} parent=0
    _
  %s4 = ssub.s32 1, %s2
  %s5 = scalar_select 0, %s4, %s2
  $region1: #{tpu_custom_call.1} parent=0
    #allocation2 [shape = 'u8[4096]{0}', space=vmem, size = 0x1000, scoped, tag = 'input window, operand 0, single buffered']
    #allocation3 [shape = 's32[1]{0}', space=sflag, size = 0x4, scoped, tag = 'scoped memory for tpu_custom_call.1']
    #allocation4 [shape = 's32[1]{0}', space=sflag, size = 0x4, scoped, tag = 'scoped memory for tpu_custom_call.1']
    #allocation5 [shape = 'u8[4096]{0}', space=vmem, size = 0x1000, scoped, tag = 'output window, operand 0, single buffered']
    %6 = vsyncpa [#allocation3], 0
    %7 = vsyncpa [#allocation4], 0
    // Predicated region
    $region2: #{tpu_custom_call.1} parent=1 // pred_check
      _
    $region3: #{tpu_custom_call.1} parent=1 // pred_check_branch
      %9 = sbr.rel (0) target = $region5
    $region4: #{tpu_custom_call.1} parent=1 // pred_region
      %11 = vsyncadd [#allocation3], 0
      %s13 = sshll.u32 %s0, 4
      %s14 = int_to_ptr.hbm [resolvable:$true] %s13
      %s15 = sshll.u32 [#allocation2], 4
      %s16 = int_to_ptr.vmem [resolvable:$true] %s15
      %18 = dma.hbm_to_vmem [thread:$0]  %s14, 128, %s16, [#allocation3]
    $region5: #{tpu_custom_call.1} parent=1 // pred_fallthru
      _
    // Predicated region
    $region6: #{tpu_custom_call.1} parent=1 // pred_check
      _
    $region7: #{tpu_custom_call.1} parent=1 // pred_check_branch
      %20 = sbr.rel (0) target = $region9
    $region8: #{tpu_custom_call.1} parent=1 // pred_region
      %22 = dma.done [#allocation3], 128
    $region9: #{tpu_custom_call.1} parent=1 // pred_fallthru
      _
    %v23 = vld [vmem:[#allocation2] sm:$0xff]
    %v24 = vmul.f32 %v23, %v23
    %25 = vadd.xlane.f32.xlu0 %v24
    %v26 = vpop.xlane.xlu0 %25
    %v27 = vrsqrt.pop %v26
    %v28 = vmul.f32 %v27, %v26
    %v29 = vmul.f32 %v28, %v27
    %v30 = vmul.f32 0.5, %v29
    %v31 = vsub.f32 1.5, %v30
    %v32 = vmul.f32 %v27, %v31
    %vm33 = vweird.f32 %v26
    %vm34 = vweird.f32 %v27
    %vm35 = vmor %vm33, %vm34
    %v36 = vsel %vm35, %v27, %v32
    %v37 = vmul.f32 %v23, %v36
    %38 = vst [vmem:[#allocation5] sm:$0xff] %v37
    // Predicated region
    $region10: #{tpu_custom_call.1} parent=1 // pred_check
      _
    $region11: #{tpu_custom_call.1} parent=1 // pred_check_branch
      %40 = sbr.rel (0) target = $region13
    $region12: #{tpu_custom_call.1} parent=1 // pred_region
      %42 = vsyncadd [#allocation4], 0
      %s44 = sshll.u32 [#allocation5], 4
      %s45 = int_to_ptr.vmem [resolvable:$true] %s44
      %s46 = sshll.u32 %s1, 4
      %s47 = int_to_ptr.hbm [resolvable:$true] %s46
      %49 = dma.vmem_to_hbm [thread:$0]  %s45, 128, %s47, [#allocation4]
    $region13: #{tpu_custom_call.1} parent=1 // pred_fallthru
      _
    // Predicated region
    $region14: #{tpu_custom_call.1} parent=1 // pred_check
      _
    $region15: #{tpu_custom_call.1} parent=1 // pred_check_branch
      %51 = sbr.rel (0) target = $region17
    $region16: #{tpu_custom_call.1} parent=1 // pred_region
      %53 = dma.done [#allocation4], 128
    $region17: #{tpu_custom_call.1} parent=1 // pred_fallthru
      _
    %54 = vsyncpa [#allocation3], 1
    %55 = vsyncpa [#allocation4], 1

</llo_original>
